<compile_context>
chip_gen: v5e
topology: v5e:2x2
jax: 0.10.0
libtpu: 0.0.40
codegen_flags: <defaults>
</compile_context>

<pallas_src>
import functools
import math

import jax
import jax.numpy as jnp
from jax.experimental import pallas as pl
from jax.experimental.pallas import tpu as pltpu


def _mhsa_kernel(x_ref, w_ref, ot_ref, *, num_heads, dim_k, dim_v, scale):
    # x tile in natural layout: (TB, Din), batch on sublanes.
    x = x_ref[...].astype(jnp.float32)
    # Transpose the small tile in-kernel -> (Din, TB), batch on lanes (lane-dense).
    xt = x.T
    w = w_ref[...].astype(jnp.float32)            # (2*Dk + Dv, Din) fused [Wq; Wk; Wv]

    # Single fused QKV projection on the MXU, f32 accumulation.
    qkv_t = jnp.dot(w, xt,
                    preferred_element_type=jnp.float32,
                    precision=jax.lax.Precision.HIGHEST)      # (2*Dk+Dv, TB)

    nh = num_heads
    dk = dim_k // nh
    dv = dim_v // nh
    qt = qkv_t[0:dim_k, :]                        # (Dk, TB)
    kt = qkv_t[dim_k:2 * dim_k, :]                # (Dk, TB)
    vt = qkv_t[2 * dim_k:2 * dim_k + dim_v, :]    # (Dv, TB)

    # dist[h1][h2]: (1, TB) per-sample scores; reduction only over the small dk
    # sublane slice.  nh is a static Python int -> fully unrolled VPU/XLU work.
    dist = [
        [
            scale * jnp.sum(
                qt[h1 * dk:(h1 + 1) * dk, :] * kt[h2 * dk:(h2 + 1) * dk, :],
                axis=0, keepdims=True)
            for h2 in range(nh)
        ]
        for h1 in range(nh)
    ]

    # Per "query" head: softmax over the nh "key" heads, then weighted sum of V.
    accs = []
    for h1 in range(nh):
        row = dist[h1]
        m = row[0]
        for h2 in range(1, nh):
            m = jnp.maximum(m, row[h2])
        e = [jnp.exp(r - m) for r in row]                     # EUP
        denom = e[0]
        for h2 in range(1, nh):
            denom = denom + e[h2]
        # Exact reciprocal: approx EUP rcp error is near the 2e-4 tolerance and the
        # kernel is memory-bound, so the divide is free anyway.
        inv = pl.reciprocal(denom, approx=False)
        acc = (e[0] * inv) * vt[0:dv, :]
        for h2 in range(1, nh):
            acc = acc + (e[h2] * inv) * vt[h2 * dv:(h2 + 1) * dv, :]
        accs.append(acc)                                       # (dv, TB), att[b, h1, d]

    # In-kernel head/feature interleave: output row r = d*nh + h, i.e. torch's
    # att.transpose(1, 2).reshape(batch, dim_v) column order (transposed here).
    rows = []
    for d in range(dv):
        for h in range(nh):
            rows.append(accs[h][d:d + 1, :])
    ot_ref[...] = jnp.concatenate(rows, axis=0).astype(ot_ref.dtype)


def _choose_tb(batch):
    """Batch-tile size: as large as possible (amortize ~0.35us per grid step), but
    keep >=2 grid steps for large batches so the 'parallel' axis shards across both
    v7x TensorCores.  At the 4096 cap the double-buffered VMEM footprint is only a
    few MB, under every generation's scoped-VMEM default (incl. v5e's 16 MiB)."""
    tb_max = 4096
    if batch <= 1024:
        return batch                      # tiny problem: one step
    half = -(-batch // 2)
    return min(tb_max, -(-half // 128) * 128)


def mhsa_pallas(x, wq, wk, wv, num_heads=2):
    """MultiHeadSelfAttention.forward(x) with PyTorch nn.Linear weights (out, in)."""
    batch, dim_in = x.shape
    dim_k = wq.shape[0]
    dim_v = wv.shape[0]
    assert dim_k % num_heads == 0 and dim_v % num_heads == 0
    dk = dim_k // num_heads
    scale = 1.0 / math.sqrt(dk)           # module's _norm_fact = 1/sqrt(dim_k // nh)

    # Fuse the three tiny projection weights into one resident operand.
    w_all = jnp.concatenate([wq, wk, wv], axis=0)          # (2*dim_k + dim_v, dim_in)

    tb = _choose_tb(batch)
    grid = (pl.cdiv(batch, tb),)

    kernel = functools.partial(_mhsa_kernel, num_heads=num_heads,
                               dim_k=dim_k, dim_v=dim_v, scale=scale)
    att_t = pl.pallas_call(
        kernel,
        out_shape=jax.ShapeDtypeStruct((dim_v, batch), x.dtype),
        grid=grid,
        in_specs=[
            pl.BlockSpec((tb, dim_in), lambda i: (i, 0)),              # x, natural layout
            pl.BlockSpec((w_all.shape[0], dim_in), lambda i: (0, 0)),  # fused W, resident
        ],
        out_specs=pl.BlockSpec((dim_v, tb), lambda i: (0, i)),         # lane-dense in batch
        compiler_params=pltpu.CompilerParams(
            dimension_semantics=("parallel",)),
    )(x, w_all)                                  # (dim_v, batch), rows already d*nh + h

    # Single small transpose back to the module's (batch, dim_v) layout.
    return att_t.T


def _reference(x, wq, wk, wv, num_heads=2):
    """Pure-JAX mirror of the PyTorch forward, for correctness checking."""
    batch, _ = x.shape
    dim_k = wq.shape[0]
    dim_v = wv.shape[0]
    nh = num_heads
    dk = dim_k // nh
    dv = dim_v // nh
    hi = jax.lax.Precision.HIGHEST
    q = jnp.dot(x, wq.T, precision=hi).reshape(batch, nh, dk)
    k = jnp.dot(x, wk.T, precision=hi).reshape(batch, nh, dk)
    v = jnp.dot(x, wv.T, precision=hi).reshape(batch, nh, dv)
    dist = jnp.einsum("bhd,bgd->bhg", q, k, precision=hi) / math.sqrt(dk)
    dist = jax.nn.softmax(dist, axis=-1)
    att = jnp.einsum("bhg,bgd->bhd", dist, v, precision=hi)
    return att.transpose(0, 2, 1).reshape(batch, dim_v)


if __name__ == "__main__":
    key = jax.random.PRNGKey(0)
    kx, kq, kk, kv = jax.random.split(key, 4)

    batch, dim_in, dim_k, dim_v, num_heads = 8, 32, 16, 16, 2
    x = jax.random.normal(kx, (batch, dim_in), dtype=jnp.float32)
    bound = 1.0 / math.sqrt(dim_in)   # nn.Linear default init range
    wq = jax.random.uniform(kq, (dim_k, dim_in), jnp.float32, -bound, bound)
    wk = jax.random.uniform(kk, (dim_k, dim_in), jnp.float32, -bound, bound)
    wv = jax.random.uniform(kv, (dim_v, dim_in), jnp.float32, -bound, bound)

    out = mhsa_pallas(x, wq, wk, wv, num_heads=num_heads)
    out = jax.block_until_ready(out)

    ref = _reference(x, wq, wk, wv, num_heads=num_heads)
    assert out.shape == (batch, dim_v), out.shape
    assert jnp.allclose(out, ref, atol=2e-4, rtol=2e-4), (
        float(jnp.max(jnp.abs(out - ref))))

    print("KERNEL_OK")
</pallas_src>

<mosaic_0001>
module attributes {stable_mosaic.version = 11 : i64} {
  func.func @_mhsa_kernel(%arg0: i32, %arg1: memref<8x32xf32, #tpu.memory_space<vmem>>, %arg2: memref<48x32xf32, #tpu.memory_space<vmem>>, %arg3: memref<16x8xf32, #tpu.memory_space<vmem>>) attributes {dimension_semantics = [#tpu.dimension_semantics<parallel>], iteration_bounds = array<i64: 1>, scalar_prefetch = 0 : i64, scratch_operands = 0 : i64, tpu.core_type = #tpu.core_type<tc>, window_params = [{transform_indices = @transform_0, window_bounds = array<i64: 8, 32>}, {pipeline_mode = #tpu.pipeline_mode<synchronous>, transform_indices = @transform_1, window_bounds = array<i64: 48, 32>}, {transform_indices = @transform_2, window_bounds = array<i64: 16, 8>}]} {
    %c0 = arith.constant 0 : index
    %c0_0 = arith.constant 0 : index
    %0 = vector.load %arg1[%c0, %c0_0] : memref<8x32xf32, #tpu.memory_space<vmem>>, vector<8x32xf32>
    %1 = tpu.transpose %0, [1, 0] : vector<8x32xf32> -> vector<32x8xf32>
    %c0_1 = arith.constant 0 : index
    %c0_2 = arith.constant 0 : index
    %2 = vector.load %arg2[%c0_1, %c0_2] : memref<48x32xf32, #tpu.memory_space<vmem>>, vector<48x32xf32>
    %cst = arith.constant dense<0.000000e+00> : vector<48x8xf32>
    %3 = tpu.matmul %2, %1, %cst {dimension_numbers = #tpu.dot_dimension_numbers<[1], [0], [0], [1], [0, 0, 1, 1], [], []>, precision = #tpu.contract_precision<fp32>} : vector<48x32xf32>, vector<32x8xf32>, vector<48x8xf32> -> vector<48x8xf32>
    %4 = vector.extract_strided_slice %3 {offsets = [0, 0], sizes = [16, 8], strides = [1, 1]} : vector<48x8xf32> to vector<16x8xf32>
    %5 = vector.extract_strided_slice %3 {offsets = [16, 0], sizes = [16, 8], strides = [1, 1]} : vector<48x8xf32> to vector<16x8xf32>
    %6 = vector.extract_strided_slice %3 {offsets = [32, 0], sizes = [16, 8], strides = [1, 1]} : vector<48x8xf32> to vector<16x8xf32>
    %7 = vector.extract_strided_slice %4 {offsets = [0, 0], sizes = [8, 8], strides = [1, 1]} : vector<16x8xf32> to vector<8x8xf32>
    %8 = vector.extract_strided_slice %5 {offsets = [0, 0], sizes = [8, 8], strides = [1, 1]} : vector<16x8xf32> to vector<8x8xf32>
    %9 = arith.mulf %7, %8 : vector<8x8xf32>
    %cst_3 = arith.constant dense<0.000000e+00> : vector<8xf32>
    %10 = vector.multi_reduction <add>, %9, %cst_3 [0] : vector<8x8xf32> to vector<8xf32>
    %11 = vector.shape_cast %10 : vector<8xf32> to vector<1x8xf32>
    %cst_4 = arith.constant 0.353553385 : f32
    %12 = vector.broadcast %cst_4 : f32 to vector<1x8xf32>
    %13 = arith.mulf %12, %11 : vector<1x8xf32>
    %14 = vector.extract_strided_slice %4 {offsets = [0, 0], sizes = [8, 8], strides = [1, 1]} : vector<16x8xf32> to vector<8x8xf32>
    %15 = vector.extract_strided_slice %5 {offsets = [8, 0], sizes = [8, 8], strides = [1, 1]} : vector<16x8xf32> to vector<8x8xf32>
    %16 = arith.mulf %14, %15 : vector<8x8xf32>
    %cst_5 = arith.constant dense<0.000000e+00> : vector<8xf32>
    %17 = vector.multi_reduction <add>, %16, %cst_5 [0] : vector<8x8xf32> to vector<8xf32>
    %18 = vector.shape_cast %17 : vector<8xf32> to vector<1x8xf32>
    %cst_6 = arith.constant 0.353553385 : f32
    %19 = vector.broadcast %cst_6 : f32 to vector<1x8xf32>
    %20 = arith.mulf %19, %18 : vector<1x8xf32>
    %21 = vector.extract_strided_slice %4 {offsets = [8, 0], sizes = [8, 8], strides = [1, 1]} : vector<16x8xf32> to vector<8x8xf32>
    %22 = vector.extract_strided_slice %5 {offsets = [0, 0], sizes = [8, 8], strides = [1, 1]} : vector<16x8xf32> to vector<8x8xf32>
    %23 = arith.mulf %21, %22 : vector<8x8xf32>
    %cst_7 = arith.constant dense<0.000000e+00> : vector<8xf32>
    %24 = vector.multi_reduction <add>, %23, %cst_7 [0] : vector<8x8xf32> to vector<8xf32>
    %25 = vector.shape_cast %24 : vector<8xf32> to vector<1x8xf32>
    %cst_8 = arith.constant 0.353553385 : f32
    %26 = vector.broadcast %cst_8 : f32 to vector<1x8xf32>
    %27 = arith.mulf %26, %25 : vector<1x8xf32>
    %28 = vector.extract_strided_slice %4 {offsets = [8, 0], sizes = [8, 8], strides = [1, 1]} : vector<16x8xf32> to vector<8x8xf32>
    %29 = vector.extract_strided_slice %5 {offsets = [8, 0], sizes = [8, 8], strides = [1, 1]} : vector<16x8xf32> to vector<8x8xf32>
    %30 = arith.mulf %28, %29 : vector<8x8xf32>
    %cst_9 = arith.constant dense<0.000000e+00> : vector<8xf32>
    %31 = vector.multi_reduction <add>, %30, %cst_9 [0] : vector<8x8xf32> to vector<8xf32>
    %32 = vector.shape_cast %31 : vector<8xf32> to vector<1x8xf32>
    %cst_10 = arith.constant 0.353553385 : f32
    %33 = vector.broadcast %cst_10 : f32 to vector<1x8xf32>
    %34 = arith.mulf %33, %32 : vector<1x8xf32>
    %35 = arith.maximumf %13, %20 : vector<1x8xf32>
    %36 = arith.subf %13, %35 : vector<1x8xf32>
    %37 = math.exp %36 : vector<1x8xf32>
    %38 = arith.subf %20, %35 : vector<1x8xf32>
    %39 = math.exp %38 : vector<1x8xf32>
    %40 = arith.addf %37, %39 : vector<1x8xf32>
    %41 = tpu.reciprocal %40 : vector<1x8xf32> -> vector<1x8xf32>
    %42 = arith.mulf %37, %41 : vector<1x8xf32>
    %43 = vector.extract_strided_slice %6 {offsets = [0, 0], sizes = [8, 8], strides = [1, 1]} : vector<16x8xf32> to vector<8x8xf32>
    %44 = vector.broadcast %42 : vector<1x8xf32> to vector<8x8xf32>
    %45 = arith.mulf %44, %43 : vector<8x8xf32>
    %46 = arith.mulf %39, %41 : vector<1x8xf32>
    %47 = vector.extract_strided_slice %6 {offsets = [8, 0], sizes = [8, 8], strides = [1, 1]} : vector<16x8xf32> to vector<8x8xf32>
    %48 = vector.broadcast %46 : vector<1x8xf32> to vector<8x8xf32>
    %49 = arith.mulf %48, %47 : vector<8x8xf32>
    %50 = arith.addf %45, %49 : vector<8x8xf32>
    %51 = arith.maximumf %27, %34 : vector<1x8xf32>
    %52 = arith.subf %27, %51 : vector<1x8xf32>
    %53 = math.exp %52 : vector<1x8xf32>
    %54 = arith.subf %34, %51 : vector<1x8xf32>
    %55 = math.exp %54 : vector<1x8xf32>
    %56 = arith.addf %53, %55 : vector<1x8xf32>
    %57 = tpu.reciprocal %56 : vector<1x8xf32> -> vector<1x8xf32>
    %58 = arith.mulf %53, %57 : vector<1x8xf32>
    %59 = vector.extract_strided_slice %6 {offsets = [0, 0], sizes = [8, 8], strides = [1, 1]} : vector<16x8xf32> to vector<8x8xf32>
    %60 = vector.broadcast %58 : vector<1x8xf32> to vector<8x8xf32>
    %61 = arith.mulf %60, %59 : vector<8x8xf32>
    %62 = arith.mulf %55, %57 : vector<1x8xf32>
    %63 = vector.extract_strided_slice %6 {offsets = [8, 0], sizes = [8, 8], strides = [1, 1]} : vector<16x8xf32> to vector<8x8xf32>
    %64 = vector.broadcast %62 : vector<1x8xf32> to vector<8x8xf32>
    %65 = arith.mulf %64, %63 : vector<8x8xf32>
    %66 = arith.addf %61, %65 : vector<8x8xf32>
    %67 = vector.extract_strided_slice %50 {offsets = [0, 0], sizes = [1, 8], strides = [1, 1]} : vector<8x8xf32> to vector<1x8xf32>
    %68 = vector.extract_strided_slice %66 {offsets = [0, 0], sizes = [1, 8], strides = [1, 1]} : vector<8x8xf32> to vector<1x8xf32>
    %69 = vector.extract_strided_slice %50 {offsets = [1, 0], sizes = [1, 8], strides = [1, 1]} : vector<8x8xf32> to vector<1x8xf32>
    %70 = vector.extract_strided_slice %66 {offsets = [1, 0], sizes = [1, 8], strides = [1, 1]} : vector<8x8xf32> to vector<1x8xf32>
    %71 = vector.extract_strided_slice %50 {offsets = [2, 0], sizes = [1, 8], strides = [1, 1]} : vector<8x8xf32> to vector<1x8xf32>
    %72 = vector.extract_strided_slice %66 {offsets = [2, 0], sizes = [1, 8], strides = [1, 1]} : vector<8x8xf32> to vector<1x8xf32>
    %73 = vector.extract_strided_slice %50 {offsets = [3, 0], sizes = [1, 8], strides = [1, 1]} : vector<8x8xf32> to vector<1x8xf32>
    %74 = vector.extract_strided_slice %66 {offsets = [3, 0], sizes = [1, 8], strides = [1, 1]} : vector<8x8xf32> to vector<1x8xf32>
    %75 = vector.extract_strided_slice %50 {offsets = [4, 0], sizes = [1, 8], strides = [1, 1]} : vector<8x8xf32> to vector<1x8xf32>
    %76 = vector.extract_strided_slice %66 {offsets = [4, 0], sizes = [1, 8], strides = [1, 1]} : vector<8x8xf32> to vector<1x8xf32>
    %77 = vector.extract_strided_slice %50 {offsets = [5, 0], sizes = [1, 8], strides = [1, 1]} : vector<8x8xf32> to vector<1x8xf32>
    %78 = vector.extract_strided_slice %66 {offsets = [5, 0], sizes = [1, 8], strides = [1, 1]} : vector<8x8xf32> to vector<1x8xf32>
    %79 = vector.extract_strided_slice %50 {offsets = [6, 0], sizes = [1, 8], strides = [1, 1]} : vector<8x8xf32> to vector<1x8xf32>
    %80 = vector.extract_strided_slice %66 {offsets = [6, 0], sizes = [1, 8], strides = [1, 1]} : vector<8x8xf32> to vector<1x8xf32>
    %81 = vector.extract_strided_slice %50 {offsets = [7, 0], sizes = [1, 8], strides = [1, 1]} : vector<8x8xf32> to vector<1x8xf32>
    %82 = vector.extract_strided_slice %66 {offsets = [7, 0], sizes = [1, 8], strides = [1, 1]} : vector<8x8xf32> to vector<1x8xf32>
    %83 = tpu.concatenate %67, %68, %69, %70, %71, %72, %73, %74, %75, %76, %77, %78, %79, %80, %81, %82 in 0 : vector<1x8xf32>, vector<1x8xf32>, vector<1x8xf32>, vector<1x8xf32>, vector<1x8xf32>, vector<1x8xf32>, vector<1x8xf32>, vector<1x8xf32>, vector<1x8xf32>, vector<1x8xf32>, vector<1x8xf32>, vector<1x8xf32>, vector<1x8xf32>, vector<1x8xf32>, vector<1x8xf32>, vector<1x8xf32> -> vector<16x8xf32>
    %c0_11 = arith.constant 0 : index
    %c0_12 = arith.constant 0 : index
    %84 = vector.load %arg3[%c0_11, %c0_12] : memref<16x8xf32, #tpu.memory_space<vmem>>, vector<16x8xf32>
    tpu.vector_store %arg3[%c0_11, %c0_12], %83 {strides = array<i32>} : memref<16x8xf32, #tpu.memory_space<vmem>>, vector<16x8xf32>,
    return
  }
  func.func @transform_0(%arg0: i32) -> (i32, i32) {
    %c0_i32 = arith.constant 0 : i32
    %c0_i32_0 = arith.constant 0 : i32
    return %arg0, %c0_i32 : i32, i32
  }
  func.func @transform_1(%arg0: i32) -> (i32, i32) {
    %c0_i32 = arith.constant 0 : i32
    %c0_i32_0 = arith.constant 0 : i32
    %c0_i32_1 = arith.constant 0 : i32
    return %c0_i32, %c0_i32_0 : i32, i32
  }
  func.func @transform_2(%arg0: i32) -> (i32, i32) {
    %c0_i32 = arith.constant 0 : i32
    %c0_i32_0 = arith.constant 0 : i32
    return %c0_i32, %arg0 : i32, i32
  }
}

</mosaic_0001>

<llo_original>
// kernel: tpu_custom_call.1
$region0: #{tpu_custom_call.1}
  #allocation0 [shape = 'u32[]', space=smem, size = 0x4, offset = 0x4, fixed_abs, tag = 'smem constant byte address 0x4 - core index']
  #allocation1 [shape = 'u32[72,128]{1,0:T(1,128)}', space=vmem, size = 0x9000, scoped, tag = 'internal scratch']
  %s0 = inlined_call_operand.vmem [shape: f32[8,32], index: 0, kind: input, shape index: {}]
  %s1 = inlined_call_operand.vmem [shape: f32[48,32], index: 1, kind: input, shape index: {}]
  %s2 = inlined_call_operand.vmem [shape: f32[16,8], index: 2, kind: output, shape index: {}]
  %s3 = sld [smem:[#allocation0]]
  $region18: #{tpu_custom_call.1} parent=0
    _
  %s5 = ssub.s32 1, %s3
  %s6 = scalar_select 0, %s5, %s3
  // Predicated region
  $region2: #{tpu_custom_call.1} parent=0 // pred_check
    _
  $region3: #{tpu_custom_call.1} parent=0 // pred_check_branch
    %8 = sbr.rel (0) target = $region5
  $region4: #{tpu_custom_call.1} parent=0 // pred_region
    _
  $region5: #{tpu_custom_call.1} parent=0 // pred_fallthru
    _
  // Predicated region
  $region6: #{tpu_custom_call.1} parent=0 // pred_check
    _
  $region7: #{tpu_custom_call.1} parent=0 // pred_check_branch
    %10 = sbr.rel (0) target = $region9
  $region8: #{tpu_custom_call.1} parent=0 // pred_region
    _
  $region9: #{tpu_custom_call.1} parent=0 // pred_fallthru
    _
  %v11 = vld [vmem:[%s0] sm:$0xff]
  %v12 = vld [vmem:[%s1] sm:$0xff]
  %v13 = vld [vmem:[%s1 + $0x8] sm:$0xff]
  %v14 = vld [vmem:[%s1 + $0x10] sm:$0xff]
  %v15 = vld [vmem:[%s1 + $0x18] sm:$0xff]
  %v16 = vld [vmem:[%s1 + $0x20] sm:$0xff]
  %v17 = vld [vmem:[%s1 + $0x28] sm:$0xff]
  %vm18 = vcmask 261120
  %v20 = vsel %vm18, %v12, 0
  %v23 = vsel %vm18, %v13, 0
  %v26 = vsel %vm18, %v14, 0
  %v29 = vsel %vm18, %v15, 0
  %v32 = vsel %vm18, %v16, 0
  %v35 = vsel %vm18, %v17, 0
  %v38 = vsel %vm18, %v11, 0
  %40 = vmatpush.xpose.msra.mxu0 0.0
  %41 = vmatpush.xpose.msra.mxu0 0.0
  %42 = vmatpush.xpose.msra.mxu0 0.0
  %43 = vmatpush.xpose.msra.mxu0 0.0
  %44 = vmatpush.xpose.msra.mxu0 0.0
  %45 = vmatpush.xpose.msra.mxu0 0.0
  %46 = vmatpush.xpose.msra.mxu0 0.0
  %47 = vmatpush.xpose.msra.mxu0 0.0
  %48 = vmatpush.xpose.msra.mxu0 0.0
  %49 = vmatpush.xpose.msra.mxu0 0.0
  %50 = vmatpush.xpose.msra.mxu0 0.0
  %51 = vmatpush.xpose.msra.mxu0 0.0
  %52 = vmatpush.xpose.msra.mxu0 0.0
  %53 = vmatpush.xpose.msra.mxu0 0.0
  %54 = vmatpush.xpose.msra.mxu0 0.0
  %v55 = vand.u32 %v38, 4294901760
  %56 = vmatpush.xpose.msra.mxu0 %v55
  %v57 = vand.u32 %v20, 4294901760
  %v58 = vsub.f32 %v20, %v57
  %v59 = vand.u32 %v58, 4294901760
  %v60 = vsub.f32 %v58, %v59
  %v61 = vand.u32 %v60, 4294901760
  %62 = vmatmul.f32.gmra.mxu0 %v61
  %v63 = vpop.f32.mrf.mxu0
  %v64 = vadd.f32 0.0, %v63
  %v65 = vand.u32 %v23, 4294901760
  %v66 = vsub.f32 %v23, %v65
  %v67 = vand.u32 %v66, 4294901760
  %v68 = vsub.f32 %v66, %v67
  %v69 = vand.u32 %v68, 4294901760
  %70 = vmatmul.f32.gmra.mxu0 %v69
  %v71 = vpop.f32.mrf.mxu0
  %v72 = vadd.f32 0.0, %v71
  %v73 = vand.u32 %v26, 4294901760
  %v74 = vsub.f32 %v26, %v73
  %v75 = vand.u32 %v74, 4294901760
  %v76 = vsub.f32 %v74, %v75
  %v77 = vand.u32 %v76, 4294901760
  %78 = vmatmul.f32.gmra.mxu0 %v77
  %v79 = vpop.f32.mrf.mxu0
  %v80 = vadd.f32 0.0, %v79
  %v81 = vand.u32 %v29, 4294901760
  %v82 = vsub.f32 %v29, %v81
  %v83 = vand.u32 %v82, 4294901760
  %v84 = vsub.f32 %v82, %v83
  %v85 = vand.u32 %v84, 4294901760
  %86 = vmatmul.f32.gmra.mxu0 %v85
  %v87 = vpop.f32.mrf.mxu0
  %v88 = vadd.f32 0.0, %v87
  %v89 = vand.u32 %v32, 4294901760
  %v90 = vsub.f32 %v32, %v89
  %v91 = vand.u32 %v90, 4294901760
  %v92 = vsub.f32 %v90, %v91
  %v93 = vand.u32 %v92, 4294901760
  %94 = vmatmul.f32.gmra.mxu0 %v93
  %v95 = vpop.f32.mrf.mxu0
  %v96 = vadd.f32 0.0, %v95
  %v97 = vand.u32 %v35, 4294901760
  %v98 = vsub.f32 %v35, %v97
  %v99 = vand.u32 %v98, 4294901760
  %v100 = vsub.f32 %v98, %v99
  %v101 = vand.u32 %v100, 4294901760
  %102 = vmatmul.f32.gmra.mxu0 %v101
  %v103 = vpop.f32.mrf.mxu0
  %v104 = vadd.f32 0.0, %v103
  %105 = vdwg.mxu0
  %106 = vmatpush.xpose.msra.mxu0 0.0
  %107 = vmatpush.xpose.msra.mxu0 0.0
  %108 = vmatpush.xpose.msra.mxu0 0.0
  %109 = vmatpush.xpose.msra.mxu0 0.0
  %110 = vmatpush.xpose.msra.mxu0 0.0
  %111 = vmatpush.xpose.msra.mxu0 0.0
  %112 = vmatpush.xpose.msra.mxu0 0.0
  %113 = vmatpush.xpose.msra.mxu0 0.0
  %114 = vmatpush.xpose.msra.mxu0 0.0
  %115 = vmatpush.xpose.msra.mxu0 0.0
  %116 = vmatpush.xpose.msra.mxu0 0.0
  %117 = vmatpush.xpose.msra.mxu0 0.0
  %118 = vmatpush.xpose.msra.mxu0 0.0
  %119 = vmatpush.xpose.msra.mxu0 0.0
  %120 = vmatpush.xpose.msra.mxu0 0.0
  %v121 = vand.u32 %v38, 4294901760
  %v122 = vsub.f32 %v38, %v121
  %v123 = vand.u32 %v122, 4294901760
  %v124 = vsub.f32 %v122, %v123
  %v125 = vand.u32 %v124, 4294901760
  %126 = vmatpush.xpose.msra.mxu0 %v125
  %v127 = vand.u32 %v20, 4294901760
  %128 = vmatmul.f32.gmra.mxu0 %v127
  %v129 = vpop.f32.mrf.mxu0
  %v130 = vadd.f32 %v64, %v129
  %v131 = vand.u32 %v23, 4294901760
  %132 = vmatmul.f32.gmra.mxu0 %v131
  %v133 = vpop.f32.mrf.mxu0
  %v134 = vadd.f32 %v72, %v133
  %v135 = vand.u32 %v26, 4294901760
  %136 = vmatmul.f32.gmra.mxu0 %v135
  %v137 = vpop.f32.mrf.mxu0
  %v138 = vadd.f32 %v80, %v137
  %v139 = vand.u32 %v29, 4294901760
  %140 = vmatmul.f32.gmra.mxu0 %v139
  %v141 = vpop.f32.mrf.mxu0
  %v142 = vadd.f32 %v88, %v141
  %v143 = vand.u32 %v32, 4294901760
  %144 = vmatmul.f32.gmra.mxu0 %v143
  %v145 = vpop.f32.mrf.mxu0
  %v146 = vadd.f32 %v96, %v145
  %v147 = vand.u32 %v35, 4294901760
  %148 = vmatmul.f32.gmra.mxu0 %v147
  %v149 = vpop.f32.mrf.mxu0
  %v150 = vadd.f32 %v104, %v149
  %151 = vdwg.mxu0
  %152 = vmatpush.xpose.msra.mxu0 0.0
  %153 = vmatpush.xpose.msra.mxu0 0.0
  %154 = vmatpush.xpose.msra.mxu0 0.0
  %155 = vmatpush.xpose.msra.mxu0 0.0
  %156 = vmatpush.xpose.msra.mxu0 0.0
  %157 = vmatpush.xpose.msra.mxu0 0.0
  %158 = vmatpush.xpose.msra.mxu0 0.0
  %159 = vmatpush.xpose.msra.mxu0 0.0
  %160 = vmatpush.xpose.msra.mxu0 0.0
  %161 = vmatpush.xpose.msra.mxu0 0.0
  %162 = vmatpush.xpose.msra.mxu0 0.0
  %163 = vmatpush.xpose.msra.mxu0 0.0
  %164 = vmatpush.xpose.msra.mxu0 0.0
  %165 = vmatpush.xpose.msra.mxu0 0.0
  %166 = vmatpush.xpose.msra.mxu0 0.0
  %v167 = vand.u32 %v38, 4294901760
  %v168 = vsub.f32 %v38, %v167
  %169 = vmatpush.xpose.msra.mxu0 %v168
  %v170 = vand.u32 %v20, 4294901760
  %v171 = vsub.f32 %v20, %v170
  %172 = vmatmul.f32.gmra.mxu0 %v171
  %v173 = vpop.f32.mrf.mxu0
  %v174 = vadd.f32 %v130, %v173
  %v175 = vand.u32 %v23, 4294901760
  %v176 = vsub.f32 %v23, %v175
  %177 = vmatmul.f32.gmra.mxu0 %v176
  %v178 = vpop.f32.mrf.mxu0
  %v179 = vadd.f32 %v134, %v178
  %v180 = vand.u32 %v26, 4294901760
  %v181 = vsub.f32 %v26, %v180
  %182 = vmatmul.f32.gmra.mxu0 %v181
  %v183 = vpop.f32.mrf.mxu0
  %v184 = vadd.f32 %v138, %v183
  %v185 = vand.u32 %v29, 4294901760
  %v186 = vsub.f32 %v29, %v185
  %187 = vmatmul.f32.gmra.mxu0 %v186
  %v188 = vpop.f32.mrf.mxu0
  %v189 = vadd.f32 %v142, %v188
  %v190 = vand.u32 %v32, 4294901760
  %v191 = vsub.f32 %v32, %v190
  %192 = vmatmul.f32.gmra.mxu0 %v191
  %v193 = vpop.f32.mrf.mxu0
  %v194 = vadd.f32 %v146, %v193
  %v195 = vand.u32 %v35, 4294901760
  %v196 = vsub.f32 %v35, %v195
  %197 = vmatmul.f32.gmra.mxu0 %v196
  %v198 = vpop.f32.mrf.mxu0
  %v199 = vadd.f32 %v150, %v198
  %200 = vdwg.mxu0
  %201 = vmatpush.xpose.msra.mxu0 0.0
  %202 = vmatpush.xpose.msra.mxu0 0.0
  %203 = vmatpush.xpose.msra.mxu0 0.0
  %204 = vmatpush.xpose.msra.mxu0 0.0
  %205 = vmatpush.xpose.msra.mxu0 0.0
  %206 = vmatpush.xpose.msra.mxu0 0.0
  %207 = vmatpush.xpose.msra.mxu0 0.0
  %208 = vmatpush.xpose.msra.mxu0 0.0
  %209 = vmatpush.xpose.msra.mxu0 0.0
  %210 = vmatpush.xpose.msra.mxu0 0.0
  %211 = vmatpush.xpose.msra.mxu0 0.0
  %212 = vmatpush.xpose.msra.mxu0 0.0
  %213 = vmatpush.xpose.msra.mxu0 0.0
  %214 = vmatpush.xpose.msra.mxu0 0.0
  %215 = vmatpush.xpose.msra.mxu0 0.0
  %v216 = vand.u32 %v38, 4294901760
  %217 = vmatpush.xpose.msra.mxu0 %v216
  %v218 = vand.u32 %v20, 4294901760
  %v219 = vsub.f32 %v20, %v218
  %v220 = vand.u32 %v219, 4294901760
  %221 = vmatmul.f32.gmra.mxu0 %v220
  %v222 = vpop.f32.mrf.mxu0
  %v223 = vadd.f32 %v174, %v222
  %v224 = vand.u32 %v23, 4294901760
  %v225 = vsub.f32 %v23, %v224
  %v226 = vand.u32 %v225, 4294901760
  %227 = vmatmul.f32.gmra.mxu0 %v226
  %v228 = vpop.f32.mrf.mxu0
  %v229 = vadd.f32 %v179, %v228
  %v230 = vand.u32 %v26, 4294901760
  %v231 = vsub.f32 %v26, %v230
  %v232 = vand.u32 %v231, 4294901760
  %233 = vmatmul.f32.gmra.mxu0 %v232
  %v234 = vpop.f32.mrf.mxu0
  %v235 = vadd.f32 %v184, %v234
  %v236 = vand.u32 %v29, 4294901760
  %v237 = vsub.f32 %v29, %v236
  %v238 = vand.u32 %v237, 4294901760
  %239 = vmatmul.f32.gmra.mxu0 %v238
  %v240 = vpop.f32.mrf.mxu0
  %v241 = vadd.f32 %v189, %v240
  %v242 = vand.u32 %v32, 4294901760
  %v243 = vsub.f32 %v32, %v242
  %v244 = vand.u32 %v243, 4294901760
  %245 = vmatmul.f32.gmra.mxu0 %v244
  %v246 = vpop.f32.mrf.mxu0
  %v247 = vadd.f32 %v194, %v246
  %v248 = vand.u32 %v35, 4294901760
  %v249 = vsub.f32 %v35, %v248
  %v250 = vand.u32 %v249, 4294901760
  %251 = vmatmul.f32.gmra.mxu0 %v250
  %v252 = vpop.f32.mrf.mxu0
  %v253 = vadd.f32 %v199, %v252
  %254 = vdwg.mxu0
  %255 = vmatpush.xpose.msra.mxu0 0.0
  %256 = vmatpush.xpose.msra.mxu0 0.0
  %257 = vmatpush.xpose.msra.mxu0 0.0
  %258 = vmatpush.xpose.msra.mxu0 0.0
  %259 = vmatpush.xpose.msra.mxu0 0.0
  %260 = vmatpush.xpose.msra.mxu0 0.0
  %261 = vmatpush.xpose.msra.mxu0 0.0
  %262 = vmatpush.xpose.msra.mxu0 0.0
  %263 = vmatpush.xpose.msra.mxu0 0.0
  %264 = vmatpush.xpose.msra.mxu0 0.0
  %265 = vmatpush.xpose.msra.mxu0 0.0
  %266 = vmatpush.xpose.msra.mxu0 0.0
  %267 = vmatpush.xpose.msra.mxu0 0.0
  %268 = vmatpush.xpose.msra.mxu0 0.0
  %269 = vmatpush.xpose.msra.mxu0 0.0
  %v270 = vand.u32 %v38, 4294901760
  %v271 = vsub.f32 %v38, %v270
  %v272 = vand.u32 %v271, 4294901760
  %273 = vmatpush.xpose.msra.mxu0 %v272
  %v274 = vand.u32 %v20, 4294901760
  %275 = vmatmul.f32.gmra.mxu0 %v274
  %v276 = vpop.f32.mrf.mxu0
  %v277 = vadd.f32 %v223, %v276
  %v278 = vand.u32 %v23, 4294901760
  %279 = vmatmul.f32.gmra.mxu0 %v278
  %v280 = vpop.f32.mrf.mxu0
  %v281 = vadd.f32 %v229, %v280
  %v282 = vand.u32 %v26, 4294901760
  %283 = vmatmul.f32.gmra.mxu0 %v282
  %v284 = vpop.f32.mrf.mxu0
  %v285 = vadd.f32 %v235, %v284
  %v286 = vand.u32 %v29, 4294901760
  %287 = vmatmul.f32.gmra.mxu0 %v286
  %v288 = vpop.f32.mrf.mxu0
  %v289 = vadd.f32 %v241, %v288
  %v290 = vand.u32 %v32, 4294901760
  %291 = vmatmul.f32.gmra.mxu0 %v290
  %v292 = vpop.f32.mrf.mxu0
  %v293 = vadd.f32 %v247, %v292
  %v294 = vand.u32 %v35, 4294901760
  %295 = vmatmul.f32.gmra.mxu0 %v294
  %v296 = vpop.f32.mrf.mxu0
  %v297 = vadd.f32 %v253, %v296
  %298 = vdwg.mxu0
  %299 = vmatpush.xpose.msra.mxu0 0.0
  %300 = vmatpush.xpose.msra.mxu0 0.0
  %301 = vmatpush.xpose.msra.mxu0 0.0
  %302 = vmatpush.xpose.msra.mxu0 0.0
  %303 = vmatpush.xpose.msra.mxu0 0.0
  %304 = vmatpush.xpose.msra.mxu0 0.0
  %305 = vmatpush.xpose.msra.mxu0 0.0
  %306 = vmatpush.xpose.msra.mxu0 0.0
  %307 = vmatpush.xpose.msra.mxu0 0.0
  %308 = vmatpush.xpose.msra.mxu0 0.0
  %309 = vmatpush.xpose.msra.mxu0 0.0
  %310 = vmatpush.xpose.msra.mxu0 0.0
  %311 = vmatpush.xpose.msra.mxu0 0.0
  %312 = vmatpush.xpose.msra.mxu0 0.0
  %313 = vmatpush.xpose.msra.mxu0 0.0
  %v314 = vand.u32 %v38, 4294901760
  %315 = vmatpush.xpose.msra.mxu0 %v314
  %v316 = vand.u32 %v20, 4294901760
  %317 = vmatmul.f32.gmra.mxu0 %v316
  %v318 = vpop.f32.mrf.mxu0
  %v319 = vadd.f32 %v277, %v318
  %v320 = vand.u32 %v23, 4294901760
  %321 = vmatmul.f32.gmra.mxu0 %v320
  %v322 = vpop.f32.mrf.mxu0
  %v323 = vadd.f32 %v281, %v322
  %v324 = vand.u32 %v26, 4294901760
  %325 = vmatmul.f32.gmra.mxu0 %v324
  %v326 = vpop.f32.mrf.mxu0
  %v327 = vadd.f32 %v285, %v326
  %v328 = vand.u32 %v29, 4294901760
  %329 = vmatmul.f32.gmra.mxu0 %v328
  %v330 = vpop.f32.mrf.mxu0
  %v331 = vadd.f32 %v289, %v330
  %v332 = vand.u32 %v32, 4294901760
  %333 = vmatmul.f32.gmra.mxu0 %v332
  %v334 = vpop.f32.mrf.mxu0
  %v335 = vadd.f32 %v293, %v334
  %v336 = vand.u32 %v35, 4294901760
  %337 = vmatmul.f32.gmra.mxu0 %v336
  %v338 = vpop.f32.mrf.mxu0
  %v339 = vadd.f32 %v297, %v338
  %340 = vdwg.mxu0
  %v341 = vmul.f32 %v319, %v327
  %vm342 = vcmask 64512
  %v343 = vsel %vm342, %v341, 0.0
  %v344 = vrot.slane %v343, 4
  %v345 = vadd.f32 %v343, %v344
  %v346 = vrot.slane %v345, 2
  %v347 = vadd.f32 %v345, %v346
  %v348 = vrot.slane %v347, 1
  %v349 = vadd.f32 %v347, %v348
  %v350 = vmul.f32 %v349, 0.35355338
  %v351 = vmul.f32 %v319, %v331
  %v352 = vsel %vm342, %v351, 0.0
  %v353 = vrot.slane %v352, 4
  %v354 = vadd.f32 %v352, %v353
  %v355 = vrot.slane %v354, 2
  %v356 = vadd.f32 %v354, %v355
  %v357 = vrot.slane %v356, 1
  %v358 = vadd.f32 %v356, %v357
  %v359 = vmul.f32 %v358, 0.35355338
  %v360 = vmul.f32 %v323, %v327
  %v361 = vsel %vm342, %v360, 0.0
  %v362 = vrot.slane %v361, 4
  %v363 = vadd.f32 %v361, %v362
  %v364 = vrot.slane %v363, 2
  %v365 = vadd.f32 %v363, %v364
  %v366 = vrot.slane %v365, 1
  %v367 = vadd.f32 %v365, %v366
  %v368 = vmul.f32 %v367, 0.35355338
  %v369 = vmul.f32 %v323, %v331
  %v370 = vsel %vm342, %v369, 0.0
  %v371 = vrot.slane %v370, 4
  %v372 = vadd.f32 %v370, %v371
  %v373 = vrot.slane %v372, 2
  %v374 = vadd.f32 %v372, %v373
  %v375 = vrot.slane %v374, 1
  %v376 = vadd.f32 %v374, %v375
  %v377 = vmul.f32 %v376, 0.35355338
  %v378 = vmax.f32 %v350, %v359
  %v379 = vsub.f32 %v350, %v378
  %v380 = vmul.f32 %v379, 1.442695
  %v381 = vpow.pop %v380
  %v382 = vsub.f32 %v359, %v378
  %v383 = vmul.f32 %v382, 1.442695
  %v384 = vpow.pop %v383
  %v385 = vadd.f32 %v381, %v384
  %v386 = vrcp.pop %v385
  %v387 = vmul.f32 %v385, %v386
  %v388 = vsub.f32 1.0, %v387
  %v389 = vmul.f32 %v386, %v388
  %v390 = vadd.f32 %v386, %v389
  %vm391 = vweird.f32 %v385
  %vm392 = vweird.f32 %v386
  %vm393 = vmor %vm391, %vm392
  %v394 = vsel %vm393, %v386, %v390
  %v395 = vand.u32 2147483647, %v385
  %vm396 = vcmp.eq.f32.partialorder %v395, 8.507059e+37
  %v397 = vand.u32 %v385, 2147483648
  %v398 = vor.u32 1.1754944e-38, %v397
  %v399 = vsel %vm396, %v398, %v394
  %v400 = vmul.f32 %v381, %v399
  %v401 = vmul.f32 %v400, %v335
  %v402 = vmul.f32 %v384, %v399
  %v403 = vmul.f32 %v402, %v339
  %v404 = vadd.f32 %v401, %v403
  %v405 = vmax.f32 %v368, %v377
  %v406 = vsub.f32 %v368, %v405
  %v407 = vmul.f32 %v406, 1.442695
  %v408 = vpow.pop %v407
  %v409 = vsub.f32 %v377, %v405
  %v410 = vmul.f32 %v409, 1.442695
  %v411 = vpow.pop %v410
  %v412 = vadd.f32 %v408, %v411
  %v413 = vrcp.pop %v412
  %v414 = vmul.f32 %v412, %v413
  %v415 = vsub.f32 1.0, %v414
  %v416 = vmul.f32 %v413, %v415
  %v417 = vadd.f32 %v413, %v416
  %vm418 = vweird.f32 %v412
  %vm419 = vweird.f32 %v413
  %vm420 = vmor %vm418, %vm419
  %v421 = vsel %vm420, %v413, %v417
  %v422 = vand.u32 2147483647, %v412
  %vm423 = vcmp.eq.f32.partialorder %v422, 8.507059e+37
  %v424 = vand.u32 %v412, 2147483648
  %v425 = vor.u32 1.1754944e-38, %v424
  %v426 = vsel %vm423, %v425, %v421
  %v427 = vmul.f32 %v408, %v426
  %v428 = vmul.f32 %v427, %v335
  %v429 = vmul.f32 %v411, %v426
  %v430 = vmul.f32 %v429, %v339
  %v431 = vadd.f32 %v428, %v430
  %v433 = vrot.slane %v431, 7
  %v436 = vrot.slane %v404, 7
  %v438 = vrot.slane %v431, 6
  %v440 = vrot.slane %v404, 6
  %v442 = vrot.slane %v431, 5
  %v444 = vrot.slane %v404, 5
  %v446 = vrot.slane %v431, 4
  %v448 = vrot.slane %v404, 4
  %v450 = vrot.slane %v431, 3
  %v452 = vrot.slane %v404, 3
  %v454 = vrot.slane %v431, 2
  %v456 = vrot.slane %v404, 2
  %v458 = vrot.slane %v431, 1
  %v460 = vrot.slane %v404, 1
  %vm462 = vcmask 1040384
  %v463 = vsel %vm462, %v404, %v433
  %vm464 = vcmask 1041408
  %v465 = vsel %vm464, %v463, %v436
  %vm466 = vcmask 1042432
  %v467 = vsel %vm466, %v465, %v438
  %vm468 = vcmask 1043456
  %v469 = vsel %vm468, %v467, %v440
  %vm470 = vcmask 1044480
  %v471 = vsel %vm470, %v469, %v442
  %vm472 = vcmask 1045504
  %v473 = vsel %vm472, %v471, %v444
  %vm474 = vcmask 1046528
  %v475 = vsel %vm474, %v473, %v446
  %v476 = vsel %vm462, %v448, %v450
  %v477 = vsel %vm464, %v476, %v452
  %v478 = vsel %vm466, %v477, %v454
  %v479 = vsel %vm468, %v478, %v456
  %v480 = vsel %vm470, %v479, %v458
  %v481 = vsel %vm472, %v480, %v460
  %v482 = vsel %vm474, %v481, %v431
  %483 = vst.msk [vmem:[%s2] sm:$0xff] %vm342, %v475
  %484 = vst.msk [vmem:[%s2 + $0x8] sm:$0xff] %vm342, %v482
  // Predicated region
  $region10: #{tpu_custom_call.1} parent=0 // pred_check
    _
  $region11: #{tpu_custom_call.1} parent=0 // pred_check_branch
    %486 = sbr.rel (0) target = $region13
  $region12: #{tpu_custom_call.1} parent=0 // pred_region
    _
  $region13: #{tpu_custom_call.1} parent=0 // pred_fallthru
    _
  // Predicated region
  $region14: #{tpu_custom_call.1} parent=0 // pred_check
    _
  $region15: #{tpu_custom_call.1} parent=0 // pred_check_branch
    %488 = sbr.rel (0) target = $region17
  $region16: #{tpu_custom_call.1} parent=0 // pred_region
    _
  $region17: #{tpu_custom_call.1} parent=0 // pred_fallthru
    _

</llo_original>
